<compile_context>
chip_gen: v7x
topology: tpu7x:2x2x1
jax: 0.10.0
libtpu: 0.0.40
codegen_flags: <defaults>
</compile_context>

<pallas_src>
import numpy as np
import jax
import jax.numpy as jnp
from jax.experimental import pallas as pl
from jax.experimental.pallas import tpu as pltpu

VMEM = pltpu.MemorySpace.VMEM
SMEM = pltpu.MemorySpace.SMEM


def _round_up(x, m):
    return ((x + m - 1) // m) * m


def _anchor_tile(ap):
    # Ap is always a multiple of 1024; prefer 2048-lane tiles when they divide.
    return 2048 if ap % 2048 == 0 else 1024


# ----------------------------------------------------------------------------
# Kernel 1: decode (get_output_and_grid hot path), tiled over (B, A)
# Only channels 0..7 ([x,y,w,h,obj,pad,pad,pad]) are read/written; the cls
# logits stay in place in HBM via input/output aliasing.
# ----------------------------------------------------------------------------
def _decode_kernel(raw_ref, grid_ref, stride_ref, out_ref):
    raw = raw_ref[...]                       # (8, T)
    g = grid_ref[...]                        # (2, T)
    st = stride_ref[...]                     # (1, T)
    xy = (raw[0:2, :] + g) * st              # rows 0..1
    wh = jnp.exp(raw[2:4, :]) * st           # EUP exp on only the 2 wh rows
    # single full-tile (8, T) store; rows 4..7 (obj + pad) pass through
    out_ref[...] = jnp.concatenate([xy, wh, raw[4:8, :]], axis=0)


def decode_outputs(raw, grid, stride):
    B, C, Ap = raw.shape                     # C = 8 + num_classes, Ap % 1024 == 0
    tile_a = _anchor_tile(Ap)
    return pl.pallas_call(
        _decode_kernel,
        out_shape=jax.ShapeDtypeStruct((B, C, Ap), raw.dtype),
        grid=(B, Ap // tile_a),
        in_specs=[
            pl.BlockSpec((None, 8, tile_a), lambda b, j: (b, 0, j)),
            pl.BlockSpec((2, tile_a), lambda b, j: (0, j)),
            pl.BlockSpec((1, tile_a), lambda b, j: (0, j)),
        ],
        out_specs=pl.BlockSpec((None, 8, tile_a), lambda b, j: (b, 0, j)),
        # decoded aliases raw: untouched channel rows (>=8, cls logits) keep
        # their original values without being moved through VMEM at all.
        input_output_aliases={0: 0},
        compiler_params=pltpu.CompilerParams(
            dimension_semantics=("parallel", "parallel")),
    )(raw, grid, stride)


# ----------------------------------------------------------------------------
# Kernel 2: batched per-image pairwise GT x anchor cost / IoU / fg-candidates,
# tiled over the anchor axis: grid = (B, Ap // TILE_A).
# ----------------------------------------------------------------------------
def _pairwise_kernel(gt_ref, valid_ref, onehot_ref, dec_ref, ctr_ref, st_ref,
                     cost_ref, iou_ref, fg_ref):
    gt = gt_ref[...]                         # (G, 4) cxcywh
    gx, gy = gt[:, 0:1], gt[:, 1:2]
    gw, gh = gt[:, 2:3], gt[:, 3:4]
    is_valid = valid_ref[...] > 0.0          # (G, 1)

    dec = dec_ref[...]                       # (C', TA) decoded head output
    px, py = dec[0:1, :], dec[1:2, :]
    pw, ph = dec[2:3, :], dec[3:4, :]
    obj = dec[4:5, :]
    cls = dec[8:, :]                         # sublane-aligned slice -> free view

    ctr = ctr_ref[...]                       # (2, TA) precomputed anchor centers
    xc, yc = ctr[0:1, :], ctr[1:2, :]
    st = st_ref[...]                         # (1, TA)

    # GT box edges (reused by both the IoU and the in-box computation)
    g_l, g_r = gx - 0.5 * gw, gx + 0.5 * gw
    g_t, g_b = gy - 0.5 * gh, gy + 0.5 * gh

    # pairwise IoU (bboxes_iou, xyxy=False)
    tl_x = jnp.maximum(g_l, px - 0.5 * pw)
    tl_y = jnp.maximum(g_t, py - 0.5 * ph)
    br_x = jnp.minimum(g_r, px + 0.5 * pw)
    br_y = jnp.minimum(g_b, py + 0.5 * ph)
    en = jnp.logical_and(tl_x < br_x, tl_y < br_y).astype(jnp.float32)
    area_i = (br_x - tl_x) * (br_y - tl_y) * en
    iou = area_i / (gw * gh + pw * ph - area_i + 1e-16)
    iou_ref[...] = iou

    # is_in_boxes (invalid GT rows masked out)
    min_b = jnp.minimum(jnp.minimum(xc - g_l, yc - g_t),
                        jnp.minimum(g_r - xc, g_b - yc))
    inb = jnp.where(jnp.logical_and(min_b > 0.0, is_valid), 1.0, 0.0)

    # is_in_centers (radius 2.5 strides)
    rs = 2.5 * st
    min_c = jnp.minimum(jnp.minimum(xc - (gx - rs), yc - (gy - rs)),
                        jnp.minimum((gx + rs) - xc, (gy + rs) - yc))
    inc = jnp.where(jnp.logical_and(min_c > 0.0, is_valid), 1.0, 0.0)

    # fg-candidate mask: any-in-box OR any-in-center (reduced in-kernel)
    fg_ref[...] = jnp.maximum(jnp.max(inb, axis=0, keepdims=True),
                              jnp.max(inc, axis=0, keepdims=True))

    # pairwise classification BCE cost via ONE (bf16) MXU matmul:
    #   sum_c BCE(p, T) = -( T @ (log p - log(1-p)) + colsum(log(1-p)) )
    p = jnp.sqrt(jax.nn.sigmoid(cls) * jax.nn.sigmoid(obj))   # (nc, TA)
    logp = jnp.maximum(jnp.log(p), -100.0)
    log1mp = jnp.maximum(jnp.log(1.0 - p), -100.0)
    colsum = jnp.sum(log1mp, axis=0, keepdims=True)           # (1, TA)
    t = onehot_ref[...].astype(jnp.bfloat16)                  # one-hot exact in bf16
    cls_cost = -(jnp.dot(t, (logp - log1mp).astype(jnp.bfloat16),
                         preferred_element_type=jnp.float32) + colsum)

    # full SimOTA cost (host later slices valid rows / candidate columns)
    cost_ref[...] = (cls_cost
                     - 3.0 * jnp.log(iou + 1e-8)
                     + 100000.0 * (1.0 - inb * inc))


def pairwise_assign_batched(gt, valid, onehot, decoded, centers, stride_all):
    B, G, _ = gt.shape
    _, C, Ap = decoded.shape
    nc = onehot.shape[2]
    tile_a = _anchor_tile(Ap)
    out_shapes = (
        jax.ShapeDtypeStruct((B, G, Ap), jnp.float32),   # cost
        jax.ShapeDtypeStruct((B, G, Ap), jnp.float32),   # pairwise IoU
        jax.ShapeDtypeStruct((B, 1, Ap), jnp.float32),   # fg-candidate mask
    )
    return pl.pallas_call(
        _pairwise_kernel,
        out_shape=out_shapes,
        grid=(B, Ap // tile_a),
        in_specs=[
            pl.BlockSpec((None, G, 4), lambda b, j: (b, 0, 0)),
            pl.BlockSpec((None, G, 1), lambda b, j: (b, 0, 0)),
            pl.BlockSpec((None, G, nc), lambda b, j: (b, 0, 0)),
            pl.BlockSpec((None, C, tile_a), lambda b, j: (b, 0, j)),
            pl.BlockSpec((2, tile_a), lambda b, j: (0, j)),
            pl.BlockSpec((1, tile_a), lambda b, j: (0, j)),
        ],
        out_specs=(
            pl.BlockSpec((None, G, tile_a), lambda b, j: (b, 0, j)),
            pl.BlockSpec((None, G, tile_a), lambda b, j: (b, 0, j)),
            pl.BlockSpec((None, 1, tile_a), lambda b, j: (b, 0, j)),
        ),
        compiler_params=pltpu.CompilerParams(
            dimension_semantics=("parallel", "parallel"),
            vmem_limit_bytes=32 * 1024 * 1024),
    )(gt, valid, onehot, decoded, centers, stride_all)


# ----------------------------------------------------------------------------
# Kernel 3: fused final losses (obj BCE sum, cls BCE sum, IoU-loss sum)
# ----------------------------------------------------------------------------
def _fused_loss_kernel(objx_ref, objt_ref, objm_ref,
                       clsx_ref, clst_ref, rowm_ref,
                       bp_ref, bt_ref, out_ref):
    # objectness BCE-with-logits over all real anchors (lane-dense (B, Ap))
    x = objx_ref[...]
    t = objt_ref[...]
    m = objm_ref[...]
    bce_o = jnp.maximum(x, 0.0) - x * t + jnp.log1p(jnp.exp(-jnp.abs(x)))
    obj_sum = jnp.sum(bce_o * m)

    # classification BCE-with-logits over matched fg anchors (row-masked)
    xc = clsx_ref[...]
    tc = clst_ref[...]
    rm = rowm_ref[...]                       # (Nf, 1)
    bce_c = jnp.maximum(xc, 0.0) - xc * tc + jnp.log1p(jnp.exp(-jnp.abs(xc)))
    cls_sum = jnp.sum(bce_c * rm)

    # IOUloss (1 - iou^2) over matched fg anchors
    p = bp_ref[...]                          # (Nf, 4) cxcywh
    g = bt_ref[...]
    px, py, pw, ph = p[:, 0:1], p[:, 1:2], p[:, 2:3], p[:, 3:4]
    gx, gy, gw, gh = g[:, 0:1], g[:, 1:2], g[:, 2:3], g[:, 3:4]
    tl_x = jnp.maximum(px - 0.5 * pw, gx - 0.5 * gw)
    tl_y = jnp.maximum(py - 0.5 * ph, gy - 0.5 * gh)
    br_x = jnp.minimum(px + 0.5 * pw, gx + 0.5 * gw)
    br_y = jnp.minimum(py + 0.5 * ph, gy + 0.5 * gh)
    en = jnp.logical_and(tl_x < br_x, tl_y < br_y).astype(jnp.float32)
    area_i = (br_x - tl_x) * (br_y - tl_y) * en
    iou = area_i / (pw * ph + gw * gh - area_i + 1e-16)
    iou_sum = jnp.sum((1.0 - iou * iou) * rm)

    out_ref[0, 0] = iou_sum
    out_ref[0, 1] = obj_sum
    out_ref[0, 2] = cls_sum


def fused_losses(obj_x, obj_t, obj_m, cls_x, cls_t, row_m, box_p, box_t):
    out = pl.pallas_call(
        _fused_loss_kernel,
        out_shape=jax.ShapeDtypeStruct((1, 3), jnp.float32),
        in_specs=[pl.BlockSpec(memory_space=VMEM)] * 8,
        out_specs=pl.BlockSpec(memory_space=SMEM),
    )(obj_x, obj_t, obj_m, cls_x, cls_t, row_m, box_p, box_t)
    return out[0, 0], out[0, 1], out[0, 2]


# ----------------------------------------------------------------------------
# Host-side orchestration (glue): padding, dynamic SimOTA matching (NumPy).
# ----------------------------------------------------------------------------
def yolox_loss_forward(outs, labels, strides, num_classes):
    n_ch = 5 + num_classes
    C = 8 + num_classes                       # channel-padded so cls starts at row 8
    B = outs[0].shape[0]

    raw_list, gx_list, gy_list, st_list = [], [], [], []
    for i, o in enumerate(outs):
        H, W = o.shape[-2:]
        raw_list.append(o.reshape(B, n_ch, H * W))            # channels-first (B, C0, HW)
        yv, xv = np.meshgrid(np.arange(H), np.arange(W), indexing="ij")
        gx_list.append(xv.reshape(-1).astype(np.float32))
        gy_list.append(yv.reshape(-1).astype(np.float32))
        st_list.append(np.full((H * W,), float(strides[i]), np.float32))

    A = int(sum(g.size for g in gx_list))
    Ap = _round_up(A, 1024)                                    # >=1024-lane tiles always
    pad = Ap - A

    gx_np = np.concatenate(gx_list)
    gy_np = np.concatenate(gy_list)
    st_np = np.concatenate(st_list)
    if pad:
        # padded anchors are placed far away so they never become candidates
        gx_np = np.concatenate([gx_np, np.full((pad,), -1e4, np.float32)])
        gy_np = np.concatenate([gy_np, np.full((pad,), -1e4, np.float32)])
        st_np = np.concatenate([st_np, np.full((pad,), float(strides[-1]), np.float32)])

    raw_cat = jnp.concatenate(raw_list, axis=2)                # (B, 5+nc, A)
    if pad:
        raw_cat = jnp.pad(raw_cat, ((0, 0), (0, 0), (0, pad)))
    # channel padding: [x,y,w,h,obj, 0,0,0, cls...] so cls is 8-sublane aligned
    raw_all = jnp.concatenate(
        [raw_cat[:, :5], jnp.zeros((B, 3, Ap), raw_cat.dtype), raw_cat[:, 5:]],
        axis=1)                                                # (B, 8+nc, Ap)

    grid_all = jnp.asarray(np.stack([gx_np, gy_np], axis=0))   # (2, Ap)
    stride_all = jnp.asarray(st_np[None, :])                   # (1, Ap)
    # anchor centers precomputed once (not per pairwise grid step)
    centers_all = jnp.asarray(np.stack([(gx_np + 0.5) * st_np,
                                        (gy_np + 0.5) * st_np], axis=0))

    decoded = decode_outputs(raw_all, grid_all, stride_all)    # (B, C, Ap), aliases raw_all

    labels_np = np.asarray(labels, np.float32)                 # (B, M, 5): cls, cx, cy, w, h
    M = labels_np.shape[1]
    nlabel = (labels_np[:, :, :5].sum(axis=2) > 0).sum(axis=1).astype(np.int32)
    num_gts = float(nlabel.sum())

    # fixed (static) GT padding -> one compile for the whole batch
    Gmax = max(8, _round_up(M, 8))
    gt_pad = np.zeros((B, Gmax, 4), np.float32)
    gt_pad[:, :M, :] = labels_np[:, :, 1:5]
    valid_pad = np.zeros((B, Gmax, 1), np.float32)
    onehot_pad = np.zeros((B, Gmax, num_classes), np.float32)
    eye = np.eye(num_classes, dtype=np.float32)
    for b in range(B):
        g = int(nlabel[b])
        valid_pad[b, :g, 0] = 1.0
        if g > 0:
            onehot_pad[b, :g, :] = eye[labels_np[b, :g, 0].astype(np.int64)]

    cost_d, iou_d, fg_d = pairwise_assign_batched(
        jnp.asarray(gt_pad), jnp.asarray(valid_pad), jnp.asarray(onehot_pad),
        decoded, centers_all, stride_all)

    # single device->host fetch for the whole batch
    # TODO(synk): shrink this further (bf16 cost / device-side top-10 IoU sums)
    # once bf16 ordering vs the f32 matching path is validated.
    cost_np = np.asarray(cost_d)                               # (B, Gmax, Ap)
    iou_np = np.asarray(iou_d)                                 # (B, Gmax, Ap)
    fg_np = np.asarray(fg_d)[:, 0, :] > 0.5                    # (B, Ap)

    cls_targets, reg_targets = [], []
    obj_targets = np.zeros((B, Ap), np.float32)
    fg_b_idx, fg_a_idx = [], []
    num_fg_total = 0.0

    for b in range(B):
        num_gt = int(nlabel[b])
        if num_gt == 0:
            continue
        fg_mask = fg_np[b, :A]                                 # (A,) candidates
        if not fg_mask.any():
            continue
        cost = cost_np[b, :num_gt, :A][:, fg_mask]
        pair_ious = iou_np[b, :num_gt, :A][:, fg_mask]

        # TODO(synk): dynamic_k_matching (data-dependent top-k + boolean scatter)
        # has no clean Pallas equivalent; kept host-side in NumPy.
        matching = np.zeros_like(cost)
        n_cand = min(10, pair_ious.shape[1])
        topk_ious = -np.sort(-pair_ious, axis=1)[:, :n_cand]
        dynamic_ks = np.clip(topk_ious.sum(1).astype(np.int32), 1, None)
        for g in range(num_gt):
            k = int(dynamic_ks[g])
            pos = np.argsort(cost[g])[:k]
            matching[g, pos] = 1.0
        anchor_matching_gt = matching.sum(0)
        multi = anchor_matching_gt > 1
        if multi.sum() > 0:
            cost_argmin = np.argmin(cost[:, multi], axis=0)
            matching[:, multi] = 0.0
            matching[cost_argmin, multi] = 1.0
        fg_mask_inboxes = matching.sum(0) > 0.0
        num_fg_img = int(fg_mask_inboxes.sum())
        if num_fg_img == 0:
            continue

        cand_idx = np.where(fg_mask)[0]
        sel_idx = cand_idx[fg_mask_inboxes]                    # final fg anchor indices

        matched_gt_inds = matching[:, fg_mask_inboxes].argmax(0)
        gt_classes = labels_np[b, :num_gt, 0].astype(np.int64)
        gt_matched_classes = gt_classes[matched_gt_inds]
        pred_ious_matched = (matching * pair_ious).sum(0)[fg_mask_inboxes]

        num_fg_total += num_fg_img
        cls_targets.append(eye[gt_matched_classes]
                           * pred_ious_matched[:, None].astype(np.float32))
        reg_targets.append(labels_np[b, :num_gt, 1:5][matched_gt_inds])
        obj_targets[b, sel_idx] = 1.0
        fg_b_idx.append(np.full((num_fg_img,), b, np.int32))
        fg_a_idx.append(sel_idx.astype(np.int32))

    if cls_targets:
        cls_targets_np = np.concatenate(cls_targets, 0)        # (Nfg, nc)
        reg_targets_np = np.concatenate(reg_targets, 0)        # (Nfg, 4)
        b_idx = np.concatenate(fg_b_idx)
        a_idx = np.concatenate(fg_a_idx)
    else:
        cls_targets_np = np.zeros((0, num_classes), np.float32)
        reg_targets_np = np.zeros((0, 4), np.float32)
        b_idx = np.zeros((0,), np.int32)
        a_idx = np.zeros((0,), np.int32)

    num_fg = max(num_fg_total, 1)
    Nfg = int(b_idx.shape[0])
    # fixed compile-time fg padding (dynamic_k <= 10 per GT -> Nfg <= 10*B*M)
    NF_MAX = max(128, _round_up(10 * B * M, 128))
    assert Nfg <= NF_MAX

    # gather fg predictions directly from the channels-first decoded tensor
    # (no full (B, A, C) transpose)
    bj = jnp.asarray(b_idx)
    aj = jnp.asarray(a_idx)
    bbox_fg = decoded[bj, 0:4, aj]                             # (Nfg, 4)
    cls_fg = decoded[bj, 8:, aj]                               # (Nfg, nc)

    cls_x = jnp.zeros((NF_MAX, num_classes), jnp.float32).at[:Nfg].set(cls_fg)
    box_p = jnp.zeros((NF_MAX, 4), jnp.float32).at[:Nfg].set(bbox_fg)
    cls_t = np.zeros((NF_MAX, num_classes), np.float32)
    cls_t[:Nfg] = cls_targets_np
    box_t = np.zeros((NF_MAX, 4), np.float32)
    box_t[:Nfg] = reg_targets_np
    row_m = np.zeros((NF_MAX, 1), np.float32)
    row_m[:Nfg] = 1.0

    obj_x = decoded[:, 4, :]                                   # (B, Ap) lane-dense
    obj_m = np.zeros((B, Ap), np.float32)
    obj_m[:, :A] = 1.0                                         # mask out padded anchors

    iou_sum, obj_sum, cls_sum = fused_losses(
        obj_x, jnp.asarray(obj_targets), jnp.asarray(obj_m),
        cls_x, jnp.asarray(cls_t), jnp.asarray(row_m),
        box_p, jnp.asarray(box_t))

    loss_iou = iou_sum / num_fg
    loss_obj = obj_sum / num_fg
    loss_cls = cls_sum / num_fg
    loss_l1 = 0.0                                              # use_l1 = False

    reg_weight = 5.0
    total = reg_weight * loss_iou + loss_obj + loss_cls + loss_l1
    return {
        "total_loss": total,
        "iou_loss": reg_weight * loss_iou,
        "l1_loss": loss_l1,
        "conf_loss": loss_obj,
        "cls_loss": loss_cls,
        "num_fg": num_fg / max(num_gts, 1),
    }


if __name__ == "__main__":
    key = jax.random.PRNGKey(0)
    num_classes = 4
    strides = [8, 16]
    sizes = [(8, 8), (4, 4)]      # 64x64 image -> 64 + 16 = 80 anchors (padded to 1024)
    B = 2
    n_ch = 5 + num_classes

    keys = jax.random.split(key, len(sizes))
    outs = [0.5 * jax.random.normal(k, (B, n_ch, h, w), jnp.float32)
            for k, (h, w) in zip(keys, sizes)]

    # labels: (B, max_labels, 5) = [class, cx, cy, w, h] in pixels; zero rows = padding
    labels = np.zeros((B, 5, 5), np.float32)
    labels[0, 0] = [1, 20.0, 20.0, 16.0, 16.0]
    labels[0, 1] = [3, 44.0, 40.0, 24.0, 20.0]
    labels[1, 0] = [0, 32.0, 32.0, 30.0, 30.0]

    loss_info = yolox_loss_forward(outs, jnp.asarray(labels), strides, num_classes)
    total = jax.block_until_ready(loss_info["total_loss"])
    assert np.isfinite(float(total))
    assert np.isfinite(float(loss_info["conf_loss"]))
    assert np.isfinite(float(loss_info["cls_loss"]))
    assert np.isfinite(float(loss_info["iou_loss"]))
    print("KERNEL_OK")
</pallas_src>

<mosaic_0001>
module attributes {stable_mosaic.version = 11 : i64} {
  func.func @_decode_kernel(%arg0: i32, %arg1: i32, %arg2: memref<1x8x1024xf32, #tpu.memory_space<vmem>>, %arg3: memref<2x1024xf32, #tpu.memory_space<vmem>>, %arg4: memref<1x1024xf32, #tpu.memory_space<vmem>>, %arg5: memref<1x8x1024xf32, #tpu.memory_space<vmem>>) attributes {dimension_semantics = [#tpu.dimension_semantics<parallel>, #tpu.dimension_semantics<parallel>], iteration_bounds = array<i64: 2, 1>, scalar_prefetch = 0 : i64, scratch_operands = 0 : i64, tpu.core_type = #tpu.core_type<tc>, window_params = [{transform_indices = @transform_0, window_bounds = array<i64: 1, 8, 1024>}, {transform_indices = @transform_1, window_bounds = array<i64: 2, 1024>}, {transform_indices = @transform_2, window_bounds = array<i64: 1, 1024>}, {transform_indices = @transform_3, window_bounds = array<i64: 1, 8, 1024>}]} {
    %c0 = arith.constant 0 : index
    %c0_0 = arith.constant 0 : index
    %c0_1 = arith.constant 0 : index
    %0 = vector.load %arg2[%c0, %c0_0, %c0_1] : memref<1x8x1024xf32, #tpu.memory_space<vmem>>, vector<1x8x1024xf32>
    %1 = vector.shape_cast %0 : vector<1x8x1024xf32> to vector<8x1024xf32>
    %c0_2 = arith.constant 0 : index
    %c0_3 = arith.constant 0 : index
    %2 = vector.load %arg3[%c0_2, %c0_3] : memref<2x1024xf32, #tpu.memory_space<vmem>>, vector<2x1024xf32>
    %c0_4 = arith.constant 0 : index
    %c0_5 = arith.constant 0 : index
    %3 = vector.load %arg4[%c0_4, %c0_5] : memref<1x1024xf32, #tpu.memory_space<vmem>>, vector<1x1024xf32>
    %4 = vector.extract_strided_slice %1 {offsets = [0, 0], sizes = [2, 1024], strides = [1, 1]} : vector<8x1024xf32> to vector<2x1024xf32>
    %5 = arith.addf %4, %2 : vector<2x1024xf32>
    %6 = vector.broadcast %3 : vector<1x1024xf32> to vector<2x1024xf32>
    %7 = arith.mulf %5, %6 : vector<2x1024xf32>
    %8 = vector.extract_strided_slice %1 {offsets = [2, 0], sizes = [2, 1024], strides = [1, 1]} : vector<8x1024xf32> to vector<2x1024xf32>
    %9 = math.exp %8 : vector<2x1024xf32>
    %10 = vector.broadcast %3 : vector<1x1024xf32> to vector<2x1024xf32>
    %11 = arith.mulf %9, %10 : vector<2x1024xf32>
    %12 = vector.extract_strided_slice %1 {offsets = [4, 0], sizes = [4, 1024], strides = [1, 1]} : vector<8x1024xf32> to vector<4x1024xf32>
    %13 = tpu.concatenate %7, %11, %12 in 0 : vector<2x1024xf32>, vector<2x1024xf32>, vector<4x1024xf32> -> vector<8x1024xf32>
    %c0_6 = arith.constant 0 : index
    %c0_7 = arith.constant 0 : index
    %c0_8 = arith.constant 0 : index
    %14 = vector.load %arg5[%c0_6, %c0_7, %c0_8] : memref<1x8x1024xf32, #tpu.memory_space<vmem>>, vector<1x8x1024xf32>
    %15 = vector.shape_cast %14 : vector<1x8x1024xf32> to vector<8x1024xf32>
    %16 = vector.shape_cast %13 : vector<8x1024xf32> to vector<1x8x1024xf32>
    tpu.vector_store %arg5[%c0_6, %c0_7, %c0_8], %16 {strides = array<i32>} : memref<1x8x1024xf32, #tpu.memory_space<vmem>>, vector<1x8x1024xf32>,
    return
  }
  func.func @transform_0(%arg0: i32, %arg1: i32) -> (i32, i32, i32) {
    %c0_i32 = arith.constant 0 : i32
    %c0_i32_0 = arith.constant 0 : i32
    return %arg0, %c0_i32, %arg1 : i32, i32, i32
  }
  func.func @transform_1(%arg0: i32, %arg1: i32) -> (i32, i32) {
    %c0_i32 = arith.constant 0 : i32
    %c0_i32_0 = arith.constant 0 : i32
    return %c0_i32, %arg1 : i32, i32
  }
  func.func @transform_2(%arg0: i32, %arg1: i32) -> (i32, i32) {
    %c0_i32 = arith.constant 0 : i32
    %c0_i32_0 = arith.constant 0 : i32
    return %c0_i32, %arg1 : i32, i32
  }
  func.func @transform_3(%arg0: i32, %arg1: i32) -> (i32, i32, i32) {
    %c0_i32 = arith.constant 0 : i32
    %c0_i32_0 = arith.constant 0 : i32
    return %arg0, %c0_i32, %arg1 : i32, i32, i32
  }
}

</mosaic_0001>

<llo_original>
// kernel: tpu_custom_call.1
$region0: #{tpu_custom_call.1}
  #allocation0 [shape = 'u32[]', space=smem, size = 0x4, offset = 0x4, fixed_abs, tag = 'smem constant byte address 0x4 - core index']
  #allocation1 [shape = 'u32[144,128]{1,0:T(1,128)}', space=vmem, size = 0x12000, scoped, tag = 'internal scratch']
  %s0 = inlined_call_operand.vmem [shape: f32[2,12,1024], index: 0, kind: input, shape index: {}, may-alias: {0,3}]
  %s1 = inlined_call_operand.vmem [shape: f32[2,1024], index: 1, kind: input, shape index: {}]
  %s2 = inlined_call_operand.vmem [shape: f32[1,1024], index: 2, kind: input, shape index: {}]
  %s3 = inlined_call_operand.vmem [shape: f32[2,12,1024], index: 3, kind: output, shape index: {}, may-alias: {0,3}]
  %s4 = sld [smem:[#allocation0]]
  $region45: #{tpu_custom_call.1} parent=0
    _
  %s6 = ssub.s32 1, %s4
  %s7 = scalar_select 0, %s6, %s4
  loop: start=0, step=1, limit=4
  $region2: #{tpu_custom_call.1} parent=0 // loop_pre_header
    _
  $region3: #{tpu_custom_call.1} parent=0 // loop_header
    %s9 = sphi 0, %s13
    %p10 = scmp.ge.s32.totalorder %s9, 4
    %s16 = sphi 0, %s28
    %s17 = sphi 0, %s24
    %s18 = sphi 0, %s16
    %s19 = sphi 0, %s17
    %s20 = sphi 0, %s18
    %s21 = sphi 0, %s19
    %s33 = sphi 0, %s35
    %s36 = sphi 0, %s33
    %s37 = sphi 0, %s36
    %s53 = sphi 0, %s37
    %s59 = sphi 0, %s61
    %s62 = sphi 0, %s59
    %s63 = sphi 0, %s62
    %s79 = sphi 0, %s63
    %s85 = sphi 0, %s87
    %s88 = sphi 0, %s85
    %s89 = sphi 0, %s88
    %s105 = sphi 0, %s89
    %s113 = sphi 0, %s115
    %s116 = sphi 0, %s113
    %s117 = sphi 0, %s116
    %s133 = sphi 0, %s117
  $region4: #{tpu_custom_call.1} parent=0 // loop_header_branch
    %12 = sbr.rel (%p10) target = $region8
  $region5: #{tpu_custom_call.1} parent=0 // loop_body
    %s14 = ssub.s32 %s9, 1
    %s15 = ssub.s32 %s9, 2
    %s22 = sadd.s32 1, %s17
    %p23 = scmp.ge.s32.totalorder %s22, 1
    %s24 = scalar_select %p23, 0, %s22
    %s25 = sadd.s32 1, %s16
    %s26 = scalar_select %p23, %s25, %s16
    %p27 = scmp.ge.s32.totalorder %s26, 2
    %s28 = scalar_select %p27, 0, %s26
    %s29 = ssub.s32 %s16, %s28
    %s30 = ssub.s32 %s17, %s24
    %s31 = sor.u32 %s29, %s30
    %p32 = scmp.eq.s32.totalorder %s31, 0
    %s34 = sadd.s32 %s33, 1
    %s35 = scalar_select %p32, %s33, %s34
    %p38 = pneg %p32
    %p39 = scmp.eq.s32.totalorder %s9, 1
    %p40 = por %p38, %p39
    %p41 = scmp.ne.s32.totalorder %s33, %s36
    %p42 = scmp.eq.s32.totalorder %s9, 0
    %p43 = por %p41, %p42
    %p44 = scmp.ne.s32.totalorder %s33, %s36
    %p45 = scmp.eq.s32.totalorder %s14, 1
    %p46 = por %p44, %p45
    %p47 = scmp.ne.s32.totalorder %s36, %s37
    %p48 = scmp.eq.s32.totalorder %s14, 0
    %p49 = por %p47, %p48
    %p50 = scmp.ne.s32.totalorder %s36, %s37
    %p51 = scmp.eq.s32.totalorder %s15, 1
    %p52 = por %p50, %p51
    %p54 = scmp.ne.s32.totalorder %s37, %s53
    %p55 = scmp.eq.s32.totalorder %s15, 0
    %p56 = por %p54, %p55
    %s57 = ssub.s32 %s17, %s24
    %p58 = scmp.eq.s32.totalorder %s57, 0
    %s60 = sadd.s32 %s59, 1
    %s61 = scalar_select %p58, %s59, %s60
    %p64 = pneg %p58
    %p65 = scmp.eq.s32.totalorder %s9, 1
    %p66 = por %p64, %p65
    %p67 = scmp.ne.s32.totalorder %s59, %s62
    %p68 = scmp.eq.s32.totalorder %s9, 0
    %p69 = por %p67, %p68
    %p70 = scmp.ne.s32.totalorder %s59, %s62
    %p71 = scmp.eq.s32.totalorder %s14, 1
    %p72 = por %p70, %p71
    %p73 = scmp.ne.s32.totalorder %s62, %s63
    %p74 = scmp.eq.s32.totalorder %s14, 0
    %p75 = por %p73, %p74
    %p76 = scmp.ne.s32.totalorder %s62, %s63
    %p77 = scmp.eq.s32.totalorder %s15, 1
    %p78 = por %p76, %p77
    %p80 = scmp.ne.s32.totalorder %s63, %s79
    %p81 = scmp.eq.s32.totalorder %s15, 0
    %p82 = por %p80, %p81
    %s83 = ssub.s32 %s17, %s24
    %p84 = scmp.eq.s32.totalorder %s83, 0
    %s86 = sadd.s32 %s85, 1
    %s87 = scalar_select %p84, %s85, %s86
    %p90 = pneg %p84
    %p91 = scmp.eq.s32.totalorder %s9, 1
    %p92 = por %p90, %p91
    %p93 = scmp.ne.s32.totalorder %s85, %s88
    %p94 = scmp.eq.s32.totalorder %s9, 0
    %p95 = por %p93, %p94
    %p96 = scmp.ne.s32.totalorder %s85, %s88
    %p97 = scmp.eq.s32.totalorder %s14, 1
    %p98 = por %p96, %p97
    %p99 = scmp.ne.s32.totalorder %s88, %s89
    %p100 = scmp.eq.s32.totalorder %s14, 0
    %p101 = por %p99, %p100
    %p102 = scmp.ne.s32.totalorder %s88, %s89
    %p103 = scmp.eq.s32.totalorder %s15, 1
    %p104 = por %p102, %p103
    %p106 = scmp.ne.s32.totalorder %s89, %s105
    %p107 = scmp.eq.s32.totalorder %s15, 0
    %p108 = por %p106, %p107
    %s109 = ssub.s32 %s16, %s28
    %s110 = ssub.s32 %s17, %s24
    %s111 = sor.u32 %s109, %s110
    %p112 = scmp.eq.s32.totalorder %s111, 0
    %s114 = sadd.s32 %s113, 1
    %s115 = scalar_select %p112, %s113, %s114
    %p118 = pneg %p112
    %p119 = scmp.eq.s32.totalorder %s9, 1
    %p120 = por %p118, %p119
    %p121 = scmp.ne.s32.totalorder %s113, %s116
    %p122 = scmp.eq.s32.totalorder %s9, 0
    %p123 = por %p121, %p122
    %p124 = scmp.ne.s32.totalorder %s113, %s116
    %p125 = scmp.eq.s32.totalorder %s14, 1
    %p126 = por %p124, %p125
    %p127 = scmp.ne.s32.totalorder %s116, %s117
    %p128 = scmp.eq.s32.totalorder %s14, 0
    %p129 = por %p127, %p128
    %p130 = scmp.ne.s32.totalorder %s116, %s117
    %p131 = scmp.eq.s32.totalorder %s15, 1
    %p132 = por %p130, %p131
    %p134 = scmp.ne.s32.totalorder %s117, %s133
    %p135 = scmp.eq.s32.totalorder %s15, 0
    %p136 = por %p134, %p135
    %p137 = scmp.le.s32.totalorder 1, %s9
    %p138 = scmp.lt.s32.totalorder %s9, 3
    %p139 = pnand %p137, %p138
    %p140 = pneg %p139
    // Predicated region
    $region9: #{tpu_custom_call.1} parent=5 // pred_check
      _
    $region10: #{tpu_custom_call.1} parent=5 // pred_check_branch
      %142 = sbr.rel (%p139) target = $region12
    $region11: #{tpu_custom_call.1} parent=5 // pred_region
      %s143 = ssub.s32 %s9, 1
      // Predicated region
      $region13: #{tpu_custom_call.1} parent=11 // pred_check
        %p144 = pneg %p75
      $region14: #{tpu_custom_call.1} parent=11 // pred_check_branch
        %146 = sbr.rel (%p144) target = $region16
      $region15: #{tpu_custom_call.1} parent=11 // pred_region
        %s147 = smul.u32 8, %s19
        %p148 = scmp.lt.s32.totalorder %s147, 7
        %s149 = scalar_select %p148, %s147, 7
        %s150 = smul.addr %s149, 2
        %s151 = scalar_lea.vmem %s1, %s150
        %s152 = smul.u32 8, %s19
      $region16: #{tpu_custom_call.1} parent=11 // pred_fallthru
        _
      // Predicated region
      $region17: #{tpu_custom_call.1} parent=11 // pred_check
        %p153 = pneg %p101
      $region18: #{tpu_custom_call.1} parent=11 // pred_check_branch
        %155 = sbr.rel (%p153) target = $region20
      $region19: #{tpu_custom_call.1} parent=11 // pred_region
        %s156 = smul.u32 8, %s19
        %p157 = scmp.lt.s32.totalorder %s156, 7
        %s158 = scalar_select %p157, %s156, 7
        %s159 = scalar_lea.vmem %s2, %s158
        %s160 = smul.u32 8, %s19
      $region20: #{tpu_custom_call.1} parent=11 // pred_fallthru
        _
    $region12: #{tpu_custom_call.1} parent=5 // pred_fallthru
      _
    %p161 = scmp.lt.s32.totalorder %s9, 2
    // Predicated region
    $region21: #{tpu_custom_call.1} parent=5 // pred_check
      %p162 = pneg %p161
    $region22: #{tpu_custom_call.1} parent=5 // pred_check_branch
      %164 = sbr.rel (%p162) target = $region24
    $region23: #{tpu_custom_call.1} parent=5 // pred_region
      // Predicated region
      $region25: #{tpu_custom_call.1} parent=23 // pred_check
        %p165 = pneg %p43
      $region26: #{tpu_custom_call.1} parent=23 // pred_check_branch
        %167 = sbr.rel (%p165) target = $region28
      $region27: #{tpu_custom_call.1} parent=23 // pred_region
        %s168 = smul.u32 8, %s17
        %p169 = scmp.lt.s32.totalorder %s16, 1
        %s170 = scalar_select %p169, %s16, 1
        %p171 = scmp.lt.s32.totalorder %s168, 7
        %s172 = scalar_select %p171, %s168, 7
        %s173 = smul.addr %s170, 16
        %s174 = sadd.s32 %s172, %s173
        %s175 = smul.addr %s174, 8
        %s176 = scalar_lea.vmem %s0, %s175
        %s177 = smul.u32 8, %s17
      $region28: #{tpu_custom_call.1} parent=23 // pred_fallthru
        _
    $region24: #{tpu_custom_call.1} parent=5 // pred_fallthru
      _
    %p178 = scmp.le.s32.totalorder 1, %s9
    %p179 = scmp.lt.s32.totalorder %s9, 3
    %p180 = pnand %p178, %p179
    %p181 = pneg %p180
    // Predicated region
    $region29: #{tpu_custom_call.1} parent=5 // pred_check
      _
    $region30: #{tpu_custom_call.1} parent=5 // pred_check_branch
      %183 = sbr.rel (%p180) target = $region32
    $region31: #{tpu_custom_call.1} parent=5 // pred_region
      %s184 = ssub.s32 %s9, 1
      %s185 = smul.u32 8, %s19
      %p186 = scmp.lt.s32.totalorder %s18, 1
      %s187 = scalar_select %p186, %s18, 1
      %p188 = scmp.lt.s32.totalorder %s185, 7
      %s189 = scalar_select %p188, %s185, 7
      %s190 = smul.addr %s187, 16
      %s191 = sadd.s32 %s189, %s190
      %s192 = smul.addr %s191, 8
      %s193 = scalar_lea.vmem %s0, %s192
      %p194 = pneg %p49
      %p195 = pneg %p46
      %s196 = smul.u32 8, %s19
      %p197 = scmp.lt.s32.totalorder %s196, 7
      %s198 = scalar_select %p197, %s196, 7
      %s199 = smul.addr %s198, 2
      %s200 = scalar_lea.vmem %s1, %s199
      %p201 = pneg %p75
      %p202 = pneg %p72
      %s203 = smul.u32 8, %s19
      %p204 = scmp.lt.s32.totalorder %s203, 7
      %s205 = scalar_select %p204, %s203, 7
      %s206 = scalar_lea.vmem %s2, %s205
      %p207 = pneg %p101
      %p208 = pneg %p98
      %p209 = pneg %p129
      %p210 = pneg %p126
      %s211 = smul.u32 8, %s19
      %p212 = scmp.lt.s32.totalorder %s18, 1
      %s213 = scalar_select %p212, %s18, 1
      %p214 = scmp.lt.s32.totalorder %s211, 7
      %s215 = scalar_select %p214, %s211, 7
      %s216 = smul.addr %s213, 16
      %s217 = sadd.s32 %s215, %s216
      %s218 = smul.addr %s217, 8
      %s219 = scalar_lea.vmem %s3, %s218
      %s220 = smul.u32 8, %s19
      %p221 = scmp.lt.s32.totalorder %s18, 1
      %s222 = scalar_select %p221, %s18, 1
      %p223 = scmp.lt.s32.totalorder %s220, 7
      %s224 = scalar_select %p223, %s220, 7
      %s225 = smul.addr %s222, 16
      %s226 = sadd.s32 %s224, %s225
      %s227 = smul.addr %s226, 8
      %s228 = scalar_lea.vmem %s0, %s227
      %s229 = smul.u32 8, %s19
      %s230 = smul.u32 8, %s19
      %p231 = scmp.lt.s32.totalorder %s230, 7
      %s232 = scalar_select %p231, %s230, 7
      %s233 = smul.addr %s232, 2
      %s234 = scalar_lea.vmem %s1, %s233
      %s235 = smul.u32 8, %s19
      %s236 = smul.u32 8, %s19
      %p237 = scmp.lt.s32.totalorder %s236, 7
      %s238 = scalar_select %p237, %s236, 7
      %s239 = scalar_lea.vmem %s2, %s238
      %s240 = smul.u32 8, %s19
      %s241 = smul.u32 8, %s19
      %p242 = scmp.lt.s32.totalorder %s18, 1
      %s243 = scalar_select %p242, %s18, 1
      %p244 = scmp.lt.s32.totalorder %s241, 7
      %s245 = scalar_select %p244, %s241, 7
      %s246 = smul.addr %s243, 16
      %s247 = sadd.s32 %s245, %s246
      %s248 = smul.addr %s247, 8
      %s249 = scalar_lea.vmem %s3, %s248
      %s250 = smul.u32 8, %s19
      %v251 = vld [vmem:[%s228] sm:$0xff]
      %v252 = vld [vmem:[%s228 + $0x8] sm:$0xff]
      %v253 = vld [vmem:[%s228 + $0x10] sm:$0xff]
      %v254 = vld [vmem:[%s228 + $0x18] sm:$0xff]
      %v255 = vld [vmem:[%s228 + $0x20] sm:$0xff]
      %v256 = vld [vmem:[%s228 + $0x28] sm:$0xff]
      %v257 = vld [vmem:[%s228 + $0x30] sm:$0xff]
      %v258 = vld [vmem:[%s228 + $0x38] sm:$0xff]
      %v259 = vld [vmem:[%s234] sm:$0xff]
      %v260 = vld [vmem:[%s234 + $0x8] sm:$0xff]
      %v261 = vld [vmem:[%s239] sm:$0xff]
      %v264 = vcombine.high %v259, %v259
      %v266 = vunpack.c.l.s4 1983009808
      %v267 = vunpack.c.0.s8 %v266
      %v268 = vlaneseq
      %v269 = vshrl.u32 %v268, 7
      %v270 = vsub.s32 %v267, %v269
      %v271 = vrot.slane %v259, %v270
      %v273 = vunpack.c.l.s4 1983009808
      %v274 = vunpack.c.0.s8 %v273
      %v275 = vlaneseq
      %v276 = vshrl.u32 %v275, 7
      %v277 = vsub.s32 %v274, %v276
      %v278 = vrot.slane %v264, %v277
      %v279 = vcombine.high %v271, %v271
      %v280 = vcombine.high %v278, %v278
      %v281 = vcombine.high %v260, %v260
      %v283 = vunpack.c.l.s4 1983009808
      %v284 = vunpack.c.0.s8 %v283
      %v285 = vlaneseq
      %v286 = vshrl.u32 %v285, 7
      %v287 = vsub.s32 %v284, %v286
      %v288 = vrot.slane %v260, %v287
      %v290 = vunpack.c.l.s4 1983009808
      %v291 = vunpack.c.0.s8 %v290
      %v292 = vlaneseq
      %v293 = vshrl.u32 %v292, 7
      %v294 = vsub.s32 %v291, %v293
      %v295 = vrot.slane %v281, %v294
      %v296 = vcombine.high %v288, %v288
      %v297 = vcombine.high %v295, %v295
      %v306 = vadd.f32 %v251, %v271
      %v307 = vadd.f32 %v252, %v279
      %v308 = vadd.f32 %v253, %v278
      %v309 = vadd.f32 %v254, %v280
      %v310 = vadd.f32 %v255, %v288
      %v311 = vadd.f32 %v256, %v296
      %v312 = vadd.f32 %v257, %v295
      %v313 = vadd.f32 %v258, %v297
      %v315 = vlaneseq
      %v316 = vshrl.u32 %v315, 7
      %v317 = vsub.s32 0, %v316
      %v318 = vrot.slane %v261, %v317
      %v319 = vlaneseq
      %v320 = vshrl.u32 %v319, 7
      %v321 = vsub.s32 1, %v320
      %v322 = vrot.slane %v261, %v321
      %v323 = vlaneseq
      %v324 = vshrl.u32 %v323, 7
      %v325 = vsub.s32 2, %v324
      %v326 = vrot.slane %v261, %v325
      %v327 = vlaneseq
      %v328 = vshrl.u32 %v327, 7
      %v329 = vsub.s32 3, %v328
      %v330 = vrot.slane %v261, %v329
      %v331 = vlaneseq
      %v332 = vshrl.u32 %v331, 7
      %v333 = vsub.s32 4, %v332
      %v334 = vrot.slane %v261, %v333
      %v335 = vlaneseq
      %v336 = vshrl.u32 %v335, 7
      %v337 = vsub.s32 5, %v336
      %v338 = vrot.slane %v261, %v337
      %v339 = vlaneseq
      %v340 = vshrl.u32 %v339, 7
      %v341 = vsub.s32 6, %v340
      %v342 = vrot.slane %v261, %v341
      %v343 = vlaneseq
      %v344 = vshrl.u32 %v343, 7
      %v345 = vsub.s32 7, %v344
      %v346 = vrot.slane %v261, %v345
      %v355 = vmul.f32 %v306, %v318
      %v356 = vmul.f32 %v307, %v322
      %v357 = vmul.f32 %v308, %v326
      %v358 = vmul.f32 %v309, %v330
      %v359 = vmul.f32 %v310, %v334
      %v360 = vmul.f32 %v311, %v338
      %v361 = vmul.f32 %v312, %v342
      %v362 = vmul.f32 %v313, %v346
      %v363 = vmul.f32 %v251, 1.442695
      %v364 = vpow.pop %v363
      %v365 = vmul.f32 %v252, 1.442695
      %v366 = vpow.pop %v365
      %v367 = vmul.f32 %v253, 1.442695
      %v368 = vpow.pop %v367
      %v369 = vmul.f32 %v254, 1.442695
      %v370 = vpow.pop %v369
      %v371 = vmul.f32 %v255, 1.442695
      %v372 = vpow.pop %v371
      %v373 = vmul.f32 %v256, 1.442695
      %v374 = vpow.pop %v373
      %v375 = vmul.f32 %v257, 1.442695
      %v376 = vpow.pop %v375
      %v377 = vmul.f32 %v258, 1.442695
      %v378 = vpow.pop %v377
      %v379 = vmul.f32 %v364, %v318
      %v380 = vmul.f32 %v366, %v322
      %v381 = vmul.f32 %v368, %v326
      %v382 = vmul.f32 %v370, %v330
      %v383 = vmul.f32 %v372, %v334
      %v384 = vmul.f32 %v374, %v338
      %v385 = vmul.f32 %v376, %v342
      %v386 = vmul.f32 %v378, %v346
      %vm387 = vcmask 1041408
      %v388 = vsel %vm387, %v355, %v379
      %v389 = vsel %vm387, %v356, %v380
      %v390 = vsel %vm387, %v357, %v381
      %v391 = vsel %vm387, %v358, %v382
      %v392 = vsel %vm387, %v359, %v383
      %v393 = vsel %vm387, %v360, %v384
      %v394 = vsel %vm387, %v361, %v385
      %v395 = vsel %vm387, %v362, %v386
      %vm396 = vcmask 1043456
      %v397 = vsel %vm396, %v388, %v251
      %v398 = vsel %vm396, %v389, %v252
      %v399 = vsel %vm396, %v390, %v253
      %v400 = vsel %vm396, %v391, %v254
      %v401 = vsel %vm396, %v392, %v255
      %v402 = vsel %vm396, %v393, %v256
      %v403 = vsel %vm396, %v394, %v257
      %v404 = vsel %vm396, %v395, %v258
      %405 = vst [vmem:[%s249] sm:$0xff] %v397
      %406 = vst [vmem:[%s249 + $0x8] sm:$0xff] %v398
      %407 = vst [vmem:[%s249 + $0x10] sm:$0xff] %v399
      %408 = vst [vmem:[%s249 + $0x18] sm:$0xff] %v400
      %409 = vst [vmem:[%s249 + $0x20] sm:$0xff] %v401
      %410 = vst [vmem:[%s249 + $0x28] sm:$0xff] %v402
      %411 = vst [vmem:[%s249 + $0x30] sm:$0xff] %v403
      %412 = vst [vmem:[%s249 + $0x38] sm:$0xff] %v404
      %s413 = smul.u32 8, %s19
      %p414 = scmp.lt.s32.totalorder %s18, 1
      %s415 = scalar_select %p414, %s18, 1
      %p416 = scmp.lt.s32.totalorder %s413, 7
      %s417 = scalar_select %p416, %s413, 7
      %s418 = smul.addr %s415, 16
      %s419 = sadd.s32 %s417, %s418
      %s420 = smul.addr %s419, 8
      %s421 = scalar_lea.vmem %s3, %s420
      // Predicated region
      $region33: #{tpu_custom_call.1} parent=31 // pred_check
        %p422 = pneg %p126
      $region34: #{tpu_custom_call.1} parent=31 // pred_check_branch
        %424 = sbr.rel (%p422) target = $region36
      $region35: #{tpu_custom_call.1} parent=31 // pred_region
        %s425 = smul.u32 8, %s19
      $region36: #{tpu_custom_call.1} parent=31 // pred_fallthru
        _
    $region32: #{tpu_custom_call.1} parent=5 // pred_fallthru
      _
    %p426 = scmp.le.s32.totalorder 2, %s9
    // Predicated region
    $region37: #{tpu_custom_call.1} parent=5 // pred_check
      %p427 = pneg %p426
    $region38: #{tpu_custom_call.1} parent=5 // pred_check_branch
      %429 = sbr.rel (%p427) target = $region40
    $region39: #{tpu_custom_call.1} parent=5 // pred_region
      %s430 = ssub.s32 %s9, 2
      // Predicated region
      $region41: #{tpu_custom_call.1} parent=39 // pred_check
        %p431 = pneg %p132
      $region42: #{tpu_custom_call.1} parent=39 // pred_check_branch
        %433 = sbr.rel (%p431) target = $region44
      $region43: #{tpu_custom_call.1} parent=39 // pred_region
        %s434 = smul.u32 8, %s21
        %p435 = scmp.lt.s32.totalorder %s20, 1
        %s436 = scalar_select %p435, %s20, 1
        %p437 = scmp.lt.s32.totalorder %s434, 7
        %s438 = scalar_select %p437, %s434, 7
        %s439 = smul.addr %s436, 16
        %s440 = sadd.s32 %s438, %s439
        %s441 = smul.addr %s440, 8
        %s442 = scalar_lea.vmem %s3, %s441
      $region44: #{tpu_custom_call.1} parent=39 // pred_fallthru
        _
    $region40: #{tpu_custom_call.1} parent=5 // pred_fallthru
      _
  $region6: #{tpu_custom_call.1} parent=0 // loop_footer
    %s13 = sadd.s32 1, %s9
  $region7: #{tpu_custom_call.1} parent=0 // loop_footer_branch
    %8 = sbr.rel target = $region3
  $region8: #{tpu_custom_call.1} parent=0 // loop_exit
    _

</llo_original>
